<compile_context>
chip_gen: v5e
topology: v5e:2x2
jax: 0.10.0
libtpu: 0.0.40
codegen_flags: <defaults>
</compile_context>

<pallas_src>
import functools

import jax
import jax.numpy as jnp
from jax.experimental import pallas as pl
from jax.experimental.pallas import tpu as pltpu


def _round_up(x, m):
    return (x + m - 1) // m * m


def _vmem_capacity_bytes():
    """Generation-aware VMEM capacity (128 MiB v5e/v6e, 64 MiB per-TC v7x)."""
    try:
        return int(pltpu.get_tpu_info().vmem_capacity_bytes)
    except Exception:
        return 64 * 1024 * 1024  # conservative fallback (v7x per-TensorCore)


def dhne_kernel(
    x0_ref, x1_ref, x2_ref,                    # (bt, D_i)  f32 input tiles
    we0_ref, be0_ref, wd0_ref, bd0_ref,        # branch-0 weights/biases (f32)
    we1_ref, be1_ref, wd1_ref, bd1_ref,        # branch-1
    we2_ref, be2_ref, wd2_ref, bd2_ref,        # branch-2
    wh_ref, bh_ref, wo_ref, bo_ref,            # hidden / output layer
    out_ref,                                   # (bt, OUT_W) bf16 packed output
):
    f32 = jnp.float32
    bf16 = jnp.bfloat16

    def encode_decode(x_ref, we_ref, be_ref, wd_ref, bd_ref):
        x = x_ref[...].astype(bf16)
        e = jnp.tanh(
            jnp.dot(x, we_ref[...].astype(bf16), preferred_element_type=f32)
            + be_ref[...]
        )
        dec = jax.nn.sigmoid(
            jnp.dot(e.astype(bf16), wd_ref[...].astype(bf16),
                    preferred_element_type=f32)
            + bd_ref[...]
        )
        return e, dec

    e0, dec0 = encode_decode(x0_ref, we0_ref, be0_ref, wd0_ref, bd0_ref)
    e1, dec1 = encode_decode(x1_ref, we1_ref, be1_ref, wd1_ref, bd1_ref)
    e2, dec2 = encode_decode(x2_ref, we2_ref, be2_ref, wd2_ref, bd2_ref)

    # Merge path: tanh applied a second time (as in the PyTorch forward); the
    # hidden layer is a partitioned matmul over the three embeddings, so no
    # lane-dimension concatenation is needed.
    E0 = we0_ref.shape[1]
    E1 = we1_ref.shape[1]
    E2 = we2_ref.shape[1]
    wh = wh_ref[...].astype(bf16)
    h = (
        jnp.dot(jnp.tanh(e0).astype(bf16), wh[0:E0, :],
                preferred_element_type=f32)
        + jnp.dot(jnp.tanh(e1).astype(bf16), wh[E0:E0 + E1, :],
                  preferred_element_type=f32)
        + jnp.dot(jnp.tanh(e2).astype(bf16), wh[E0 + E1:E0 + E1 + E2, :],
                  preferred_element_type=f32)
        + bh_ref[...]
    )

    # Output layer has a single column -> VPU multiply + row reduce instead of
    # a 1-lane MXU matmul.
    merged = jax.nn.sigmoid(
        jnp.sum(h * wo_ref[...], axis=-1, keepdims=True) + bo_ref[...]
    )

    # Pack dec0|dec1|dec2|merged|zeros into the lane-dense bf16 output block.
    D0 = x0_ref.shape[1]
    D1 = x1_ref.shape[1]
    D2 = x2_ref.shape[1]
    d_sum = D0 + D1 + D2
    od = out_ref.dtype
    out_ref[...] = jnp.zeros(out_ref.shape, od)          # zero the pad columns
    out_ref[:, 0:D0] = dec0.astype(od)
    out_ref[:, D0:D0 + D1] = dec1.astype(od)
    out_ref[:, D0 + D1:d_sum] = dec2.astype(od)
    out_ref[:, d_sum:d_sum + 1] = merged.astype(od)


@functools.partial(jax.jit, static_argnames=("batch_tile",))
def dhne_forward_packed(x0, x1, x2, params, batch_tile=None):
    """Fused DHNE forward.  Returns the packed bf16 slab
    (B_pad, round_up(D_sum+1, 128)) laid out as dec0|dec1|dec2|merged|zeros.
    """
    f32 = jnp.float32
    bf16 = jnp.bfloat16
    LANE = 128

    B = x0.shape[0]
    D0, D1, D2 = x0.shape[1], x1.shape[1], x2.shape[1]
    D_sum = D0 + D1 + D2
    E_sum = (params["we0"].shape[1] + params["we1"].shape[1]
             + params["we2"].shape[1])
    H = params["wh"].shape[1]
    OUT_W = _round_up(D_sum + 1, LANE)

    # ---- generation-aware VMEM sizing --------------------------------------
    vmem_cap = _vmem_capacity_bytes()
    vmem_limit = min(48 * 1024 * 1024, int(vmem_cap * 0.6))

    if batch_tile is None:
        # Per-row VMEM footprint: lane-padded f32 input tiles + bf16 output
        # (both double-buffered) + a rough allowance for in-kernel temporaries
        # (bf16 casts, e_i, dec_i, h, merged).
        in_row = 4 * (_round_up(D0, LANE) + _round_up(D1, LANE)
                      + _round_up(D2, LANE))
        out_row = 2 * OUT_W
        tmp_row = (2 * in_row
                   + 8 * _round_up(E_sum, LANE)
                   + 8 * _round_up(H, LANE)
                   + 2 * OUT_W)
        per_row = 2 * (in_row + out_row) + tmp_row
        budget = vmem_limit // 2
        bt = (budget // per_row) // 16 * 16
        bt = max(16, min(bt, 8192))
    else:
        bt = max(16, (int(batch_tile) // 16) * 16)

    B16 = _round_up(B, 16)
    bt = min(bt, B16)
    # Keep >= 2 grid steps when the batch allows so both v7x TensorCores work.
    if B16 > 16 and bt > (B16 + 1) // 2:
        bt = max(16, _round_up((B16 + 1) // 2, 16))
    B_pad = _round_up(B, bt)

    x0 = x0.astype(f32)
    x1 = x1.astype(f32)
    x2 = x2.astype(f32)
    if B_pad != B:
        pad = ((0, B_pad - B), (0, 0))
        x0 = jnp.pad(x0, pad)
        x1 = jnp.pad(x1, pad)
        x2 = jnp.pad(x2, pad)

    wo_row = params["wo"].reshape(1, H).astype(f32)
    bo = params["bo"].reshape(1, 1).astype(f32)
    weight_args = (
        params["we0"].astype(f32), params["be0"].astype(f32),
        params["wd0"].astype(f32), params["bd0"].astype(f32),
        params["we1"].astype(f32), params["be1"].astype(f32),
        params["wd1"].astype(f32), params["bd1"].astype(f32),
        params["we2"].astype(f32), params["be2"].astype(f32),
        params["wd2"].astype(f32), params["bd2"].astype(f32),
        params["wh"].astype(f32), params["bh"].astype(f32),
        wo_row, bo,
    )

    def _pin(arr):  # weights/biases pinned to block (0,0) on every grid step
        return pl.BlockSpec(arr.shape, lambda i: (0, 0))

    def _x_spec(d):
        return pl.BlockSpec((bt, d), lambda i: (i, 0))

    grid = (B_pad // bt,)

    out = pl.pallas_call(
        dhne_kernel,
        out_shape=jax.ShapeDtypeStruct((B_pad, OUT_W), bf16),
        grid_spec=pltpu.PrefetchScalarGridSpec(
            num_scalar_prefetch=0,
            grid=grid,
            in_specs=[_x_spec(D0), _x_spec(D1), _x_spec(D2)]
                     + [_pin(w) for w in weight_args],
            out_specs=pl.BlockSpec((bt, OUT_W), lambda i: (i, 0)),
        ),
        compiler_params=pltpu.CompilerParams(
            dimension_semantics=("parallel",),
            vmem_limit_bytes=vmem_limit,
        ),
    )(x0, x1, x2, *weight_args)

    return out


def dhne_forward(x0, x1, x2, params, batch_tile=None):
    """Matches the PyTorch module output: [decode0, decode1, decode2, merged].

    NOTE: downstream code that can consume the packed bf16 slab directly
    should call `dhne_forward_packed` and skip this re-slicing pass.
    """
    B = x0.shape[0]
    D0, D1, D2 = x0.shape[1], x1.shape[1], x2.shape[1]
    D_sum = D0 + D1 + D2
    out = dhne_forward_packed(x0, x1, x2, params, batch_tile=batch_tile)
    dec0 = out[:B, :D0].astype(jnp.float32)
    dec1 = out[:B, D0:D0 + D1].astype(jnp.float32)
    dec2 = out[:B, D0 + D1:D_sum].astype(jnp.float32)
    merged = out[:B, D_sum:D_sum + 1].astype(jnp.float32)
    return dec0, dec1, dec2, merged


def init_params(key, dim_feature, embedding_size, hidden_size):
    """Deterministic parameter init (shapes match the PyTorch module;
    weights stored as (in_features, out_features))."""
    ks = jax.random.split(key, 8)

    def lin(k, d_in, d_out):
        w = jax.random.normal(k, (d_in, d_out), jnp.float32) * 0.1
        b = jnp.full((1, d_out), 0.01, jnp.float32)
        return w, b

    we0, be0 = lin(ks[0], dim_feature[0], embedding_size[0])
    we1, be1 = lin(ks[1], dim_feature[1], embedding_size[1])
    we2, be2 = lin(ks[2], dim_feature[2], embedding_size[2])
    wd0, bd0 = lin(ks[3], embedding_size[0], dim_feature[0])
    wd1, bd1 = lin(ks[4], embedding_size[1], dim_feature[1])
    wd2, bd2 = lin(ks[5], embedding_size[2], dim_feature[2])
    wh, bh = lin(ks[6], sum(embedding_size), hidden_size)
    wo, bo = lin(ks[7], hidden_size, 1)

    return dict(
        we0=we0, be0=be0, we1=we1, be1=be1, we2=we2, be2=be2,
        wd0=wd0, bd0=bd0, wd1=wd1, bd1=bd1, wd2=wd2, bd2=bd2,
        wh=wh, bh=bh, wo=wo, bo=bo,
    )


def reference_forward(x0, x1, x2, p):
    """Plain-JAX reference mirroring the PyTorch forward (same bf16-matmul /
    f32-accumulate numerics as the kernel)."""
    bf16 = jnp.bfloat16
    f32 = jnp.float32

    def lin(x, w, b):
        return jnp.dot(x.astype(bf16), w.astype(bf16),
                       preferred_element_type=f32) + b

    e0 = jnp.tanh(lin(x0, p["we0"], p["be0"]))
    d0 = jax.nn.sigmoid(lin(e0, p["wd0"], p["bd0"]))
    e1 = jnp.tanh(lin(x1, p["we1"], p["be1"]))
    d1 = jax.nn.sigmoid(lin(e1, p["wd1"], p["bd1"]))
    e2 = jnp.tanh(lin(x2, p["we2"], p["be2"]))
    d2 = jax.nn.sigmoid(lin(e2, p["wd2"], p["bd2"]))

    merged = jnp.tanh(jnp.concatenate([e0, e1, e2], axis=1))
    h = lin(merged, p["wh"], p["bh"])
    wo_row = p["wo"].reshape(1, -1).astype(f32)
    m = jax.nn.sigmoid(jnp.sum(h * wo_row, axis=-1, keepdims=True)
                       + p["bo"].reshape(1, 1))
    return d0, d1, d2, m


if __name__ == "__main__":
    # Small shapes consistent with the module.
    dim_feature = [32, 24, 16]
    embedding_size = [16, 16, 16]
    hidden_size = 32
    batch = 8

    key = jax.random.PRNGKey(0)
    k_x0, k_x1, k_x2, k_p = jax.random.split(key, 4)
    x0 = jax.random.normal(k_x0, (batch, dim_feature[0]), jnp.float32)
    x1 = jax.random.normal(k_x1, (batch, dim_feature[1]), jnp.float32)
    x2 = jax.random.normal(k_x2, (batch, dim_feature[2]), jnp.float32)

    params = init_params(k_p, dim_feature, embedding_size, hidden_size)

    outs = dhne_forward(x0, x1, x2, params)
    outs = jax.block_until_ready(outs)

    refs = reference_forward(x0, x1, x2, params)
    for o, r in zip(outs, refs):
        assert o.shape == r.shape, (o.shape, r.shape)
        # Kernel outputs are bf16-quantized (post-sigmoid/tanh values in
        # [0, 1]); 1e-2 absolute tolerance covers the cast.
        assert jnp.allclose(o, r, atol=1e-2, rtol=1e-2)

    print("KERNEL_OK")
</pallas_src>

<mosaic_0001>
module attributes {stable_mosaic.version = 11 : i64} {
  func.func @dhne_kernel(%arg0: i32, %arg1: memref<16x32xf32, #tpu.memory_space<vmem>>, %arg2: memref<16x24xf32, #tpu.memory_space<vmem>>, %arg3: memref<16x16xf32, #tpu.memory_space<vmem>>, %arg4: memref<32x16xf32, #tpu.memory_space<vmem>>, %arg5: memref<1x16xf32, #tpu.memory_space<vmem>>, %arg6: memref<16x32xf32, #tpu.memory_space<vmem>>, %arg7: memref<1x32xf32, #tpu.memory_space<vmem>>, %arg8: memref<24x16xf32, #tpu.memory_space<vmem>>, %arg9: memref<1x16xf32, #tpu.memory_space<vmem>>, %arg10: memref<16x24xf32, #tpu.memory_space<vmem>>, %arg11: memref<1x24xf32, #tpu.memory_space<vmem>>, %arg12: memref<16x16xf32, #tpu.memory_space<vmem>>, %arg13: memref<1x16xf32, #tpu.memory_space<vmem>>, %arg14: memref<16x16xf32, #tpu.memory_space<vmem>>, %arg15: memref<1x16xf32, #tpu.memory_space<vmem>>, %arg16: memref<48x32xf32, #tpu.memory_space<vmem>>, %arg17: memref<1x32xf32, #tpu.memory_space<vmem>>, %arg18: memref<1x32xf32, #tpu.memory_space<vmem>>, %arg19: memref<1x1xf32, #tpu.memory_space<vmem>>, %arg20: memref<16x128xbf16, #tpu.memory_space<vmem>>) attributes {dimension_semantics = [#tpu.dimension_semantics<parallel>], iteration_bounds = array<i64: 1>, scalar_prefetch = 0 : i64, scratch_operands = 0 : i64, tpu.core_type = #tpu.core_type<tc>, window_params = [{transform_indices = @transform_0, window_bounds = array<i64: 16, 32>}, {transform_indices = @transform_1, window_bounds = array<i64: 16, 24>}, {transform_indices = @transform_2, window_bounds = array<i64: 16, 16>}, {pipeline_mode = #tpu.pipeline_mode<synchronous>, transform_indices = @transform_3, window_bounds = array<i64: 32, 16>}, {pipeline_mode = #tpu.pipeline_mode<synchronous>, transform_indices = @transform_4, window_bounds = array<i64: 1, 16>}, {pipeline_mode = #tpu.pipeline_mode<synchronous>, transform_indices = @transform_5, window_bounds = array<i64: 16, 32>}, {pipeline_mode = #tpu.pipeline_mode<synchronous>, transform_indices = @transform_6, window_bounds = array<i64: 1, 32>}, {pipeline_mode = #tpu.pipeline_mode<synchronous>, transform_indices = @transform_7, window_bounds = array<i64: 24, 16>}, {pipeline_mode = #tpu.pipeline_mode<synchronous>, transform_indices = @transform_8, window_bounds = array<i64: 1, 16>}, {pipeline_mode = #tpu.pipeline_mode<synchronous>, transform_indices = @transform_9, window_bounds = array<i64: 16, 24>}, {pipeline_mode = #tpu.pipeline_mode<synchronous>, transform_indices = @transform_10, window_bounds = array<i64: 1, 24>}, {pipeline_mode = #tpu.pipeline_mode<synchronous>, transform_indices = @transform_11, window_bounds = array<i64: 16, 16>}, {pipeline_mode = #tpu.pipeline_mode<synchronous>, transform_indices = @transform_12, window_bounds = array<i64: 1, 16>}, {pipeline_mode = #tpu.pipeline_mode<synchronous>, transform_indices = @transform_13, window_bounds = array<i64: 16, 16>}, {pipeline_mode = #tpu.pipeline_mode<synchronous>, transform_indices = @transform_14, window_bounds = array<i64: 1, 16>}, {pipeline_mode = #tpu.pipeline_mode<synchronous>, transform_indices = @transform_15, window_bounds = array<i64: 48, 32>}, {pipeline_mode = #tpu.pipeline_mode<synchronous>, transform_indices = @transform_16, window_bounds = array<i64: 1, 32>}, {pipeline_mode = #tpu.pipeline_mode<synchronous>, transform_indices = @transform_17, window_bounds = array<i64: 1, 32>}, {pipeline_mode = #tpu.pipeline_mode<synchronous>, transform_indices = @transform_18, window_bounds = array<i64: 1, 1>}, {transform_indices = @transform_19, window_bounds = array<i64: 16, 128>}]} {
    %c0 = arith.constant 0 : index
    %c0_0 = arith.constant 0 : index
    %0 = vector.load %arg1[%c0, %c0_0] : memref<16x32xf32, #tpu.memory_space<vmem>>, vector<16x32xf32>
    %1 = arith.truncf %0 : vector<16x32xf32> to vector<16x32xbf16>
    %c0_1 = arith.constant 0 : index
    %c0_2 = arith.constant 0 : index
    %2 = vector.load %arg4[%c0_1, %c0_2] : memref<32x16xf32, #tpu.memory_space<vmem>>, vector<32x16xf32>
    %3 = arith.truncf %2 : vector<32x16xf32> to vector<32x16xbf16>
    %cst = arith.constant dense<0.000000e+00> : vector<16x16xf32>
    %4 = tpu.matmul %1, %3, %cst {dimension_numbers = #tpu.dot_dimension_numbers<[1], [0], [0], [1], [0, 0, 1, 1], [], []>} : vector<16x32xbf16>, vector<32x16xbf16>, vector<16x16xf32> -> vector<16x16xf32>
    %c0_3 = arith.constant 0 : index
    %c0_4 = arith.constant 0 : index
    %5 = vector.load %arg5[%c0_3, %c0_4] : memref<1x16xf32, #tpu.memory_space<vmem>>, vector<1x16xf32>
    %6 = vector.broadcast %5 : vector<1x16xf32> to vector<16x16xf32>
    %7 = arith.addf %4, %6 : vector<16x16xf32>
    %8 = math.tanh %7 : vector<16x16xf32>
    %9 = arith.truncf %8 : vector<16x16xf32> to vector<16x16xbf16>
    %c0_5 = arith.constant 0 : index
    %c0_6 = arith.constant 0 : index
    %10 = vector.load %arg6[%c0_5, %c0_6] : memref<16x32xf32, #tpu.memory_space<vmem>>, vector<16x32xf32>
    %11 = arith.truncf %10 : vector<16x32xf32> to vector<16x32xbf16>
    %cst_7 = arith.constant dense<0.000000e+00> : vector<16x32xf32>
    %12 = tpu.matmul %9, %11, %cst_7 {dimension_numbers = #tpu.dot_dimension_numbers<[1], [0], [0], [1], [0, 0, 1, 1], [], []>} : vector<16x16xbf16>, vector<16x32xbf16>, vector<16x32xf32> -> vector<16x32xf32>
    %c0_8 = arith.constant 0 : index
    %c0_9 = arith.constant 0 : index
    %13 = vector.load %arg7[%c0_8, %c0_9] : memref<1x32xf32, #tpu.memory_space<vmem>>, vector<1x32xf32>
    %14 = vector.broadcast %13 : vector<1x32xf32> to vector<16x32xf32>
    %15 = arith.addf %12, %14 : vector<16x32xf32>
    %16 = arith.negf %15 : vector<16x32xf32>
    %17 = math.exp %16 : vector<16x32xf32>
    %cst_10 = arith.constant 1.000000e+00 : f32
    %18 = vector.broadcast %cst_10 : f32 to vector<16x32xf32>
    %19 = arith.addf %18, %17 : vector<16x32xf32>
    %20 = arith.divf %18, %19 : vector<16x32xf32>
    %c0_11 = arith.constant 0 : index
    %c0_12 = arith.constant 0 : index
    %21 = vector.load %arg2[%c0_11, %c0_12] : memref<16x24xf32, #tpu.memory_space<vmem>>, vector<16x24xf32>
    %22 = arith.truncf %21 : vector<16x24xf32> to vector<16x24xbf16>
    %c0_13 = arith.constant 0 : index
    %c0_14 = arith.constant 0 : index
    %23 = vector.load %arg8[%c0_13, %c0_14] : memref<24x16xf32, #tpu.memory_space<vmem>>, vector<24x16xf32>
    %24 = arith.truncf %23 : vector<24x16xf32> to vector<24x16xbf16>
    %cst_15 = arith.constant dense<0.000000e+00> : vector<16x16xf32>
    %25 = tpu.matmul %22, %24, %cst_15 {dimension_numbers = #tpu.dot_dimension_numbers<[1], [0], [0], [1], [0, 0, 1, 1], [], []>} : vector<16x24xbf16>, vector<24x16xbf16>, vector<16x16xf32> -> vector<16x16xf32>
    %c0_16 = arith.constant 0 : index
    %c0_17 = arith.constant 0 : index
    %26 = vector.load %arg9[%c0_16, %c0_17] : memref<1x16xf32, #tpu.memory_space<vmem>>, vector<1x16xf32>
    %27 = vector.broadcast %26 : vector<1x16xf32> to vector<16x16xf32>
    %28 = arith.addf %25, %27 : vector<16x16xf32>
    %29 = math.tanh %28 : vector<16x16xf32>
    %30 = arith.truncf %29 : vector<16x16xf32> to vector<16x16xbf16>
    %c0_18 = arith.constant 0 : index
    %c0_19 = arith.constant 0 : index
    %31 = vector.load %arg10[%c0_18, %c0_19] : memref<16x24xf32, #tpu.memory_space<vmem>>, vector<16x24xf32>
    %32 = arith.truncf %31 : vector<16x24xf32> to vector<16x24xbf16>
    %cst_20 = arith.constant dense<0.000000e+00> : vector<16x24xf32>
    %33 = tpu.matmul %30, %32, %cst_20 {dimension_numbers = #tpu.dot_dimension_numbers<[1], [0], [0], [1], [0, 0, 1, 1], [], []>} : vector<16x16xbf16>, vector<16x24xbf16>, vector<16x24xf32> -> vector<16x24xf32>
    %c0_21 = arith.constant 0 : index
    %c0_22 = arith.constant 0 : index
    %34 = vector.load %arg11[%c0_21, %c0_22] : memref<1x24xf32, #tpu.memory_space<vmem>>, vector<1x24xf32>
    %35 = vector.broadcast %34 : vector<1x24xf32> to vector<16x24xf32>
    %36 = arith.addf %33, %35 : vector<16x24xf32>
    %37 = arith.negf %36 : vector<16x24xf32>
    %38 = math.exp %37 : vector<16x24xf32>
    %cst_23 = arith.constant 1.000000e+00 : f32
    %39 = vector.broadcast %cst_23 : f32 to vector<16x24xf32>
    %40 = arith.addf %39, %38 : vector<16x24xf32>
    %41 = arith.divf %39, %40 : vector<16x24xf32>
    %c0_24 = arith.constant 0 : index
    %c0_25 = arith.constant 0 : index
    %42 = vector.load %arg3[%c0_24, %c0_25] : memref<16x16xf32, #tpu.memory_space<vmem>>, vector<16x16xf32>
    %43 = arith.truncf %42 : vector<16x16xf32> to vector<16x16xbf16>
    %c0_26 = arith.constant 0 : index
    %c0_27 = arith.constant 0 : index
    %44 = vector.load %arg12[%c0_26, %c0_27] : memref<16x16xf32, #tpu.memory_space<vmem>>, vector<16x16xf32>
    %45 = arith.truncf %44 : vector<16x16xf32> to vector<16x16xbf16>
    %cst_28 = arith.constant dense<0.000000e+00> : vector<16x16xf32>
    %46 = tpu.matmul %43, %45, %cst_28 {dimension_numbers = #tpu.dot_dimension_numbers<[1], [0], [0], [1], [0, 0, 1, 1], [], []>} : vector<16x16xbf16>, vector<16x16xbf16>, vector<16x16xf32> -> vector<16x16xf32>
    %c0_29 = arith.constant 0 : index
    %c0_30 = arith.constant 0 : index
    %47 = vector.load %arg13[%c0_29, %c0_30] : memref<1x16xf32, #tpu.memory_space<vmem>>, vector<1x16xf32>
    %48 = vector.broadcast %47 : vector<1x16xf32> to vector<16x16xf32>
    %49 = arith.addf %46, %48 : vector<16x16xf32>
    %50 = math.tanh %49 : vector<16x16xf32>
    %51 = arith.truncf %50 : vector<16x16xf32> to vector<16x16xbf16>
    %c0_31 = arith.constant 0 : index
    %c0_32 = arith.constant 0 : index
    %52 = vector.load %arg14[%c0_31, %c0_32] : memref<16x16xf32, #tpu.memory_space<vmem>>, vector<16x16xf32>
    %53 = arith.truncf %52 : vector<16x16xf32> to vector<16x16xbf16>
    %cst_33 = arith.constant dense<0.000000e+00> : vector<16x16xf32>
    %54 = tpu.matmul %51, %53, %cst_33 {dimension_numbers = #tpu.dot_dimension_numbers<[1], [0], [0], [1], [0, 0, 1, 1], [], []>} : vector<16x16xbf16>, vector<16x16xbf16>, vector<16x16xf32> -> vector<16x16xf32>
    %c0_34 = arith.constant 0 : index
    %c0_35 = arith.constant 0 : index
    %55 = vector.load %arg15[%c0_34, %c0_35] : memref<1x16xf32, #tpu.memory_space<vmem>>, vector<1x16xf32>
    %56 = vector.broadcast %55 : vector<1x16xf32> to vector<16x16xf32>
    %57 = arith.addf %54, %56 : vector<16x16xf32>
    %58 = arith.negf %57 : vector<16x16xf32>
    %59 = math.exp %58 : vector<16x16xf32>
    %cst_36 = arith.constant 1.000000e+00 : f32
    %60 = vector.broadcast %cst_36 : f32 to vector<16x16xf32>
    %61 = arith.addf %60, %59 : vector<16x16xf32>
    %62 = arith.divf %60, %61 : vector<16x16xf32>
    %c0_37 = arith.constant 0 : index
    %c0_38 = arith.constant 0 : index
    %63 = vector.load %arg16[%c0_37, %c0_38] : memref<48x32xf32, #tpu.memory_space<vmem>>, vector<48x32xf32>
    %64 = arith.truncf %63 : vector<48x32xf32> to vector<48x32xbf16>
    %65 = math.tanh %8 : vector<16x16xf32>
    %66 = arith.truncf %65 : vector<16x16xf32> to vector<16x16xbf16>
    %67 = vector.extract_strided_slice %64 {offsets = [0, 0], sizes = [16, 32], strides = [1, 1]} : vector<48x32xbf16> to vector<16x32xbf16>
    %cst_39 = arith.constant dense<0.000000e+00> : vector<16x32xf32>
    %68 = tpu.matmul %66, %67, %cst_39 {dimension_numbers = #tpu.dot_dimension_numbers<[1], [0], [0], [1], [0, 0, 1, 1], [], []>} : vector<16x16xbf16>, vector<16x32xbf16>, vector<16x32xf32> -> vector<16x32xf32>
    %69 = math.tanh %29 : vector<16x16xf32>
    %70 = arith.truncf %69 : vector<16x16xf32> to vector<16x16xbf16>
    %71 = vector.extract_strided_slice %64 {offsets = [16, 0], sizes = [16, 32], strides = [1, 1]} : vector<48x32xbf16> to vector<16x32xbf16>
    %cst_40 = arith.constant dense<0.000000e+00> : vector<16x32xf32>
    %72 = tpu.matmul %70, %71, %cst_40 {dimension_numbers = #tpu.dot_dimension_numbers<[1], [0], [0], [1], [0, 0, 1, 1], [], []>} : vector<16x16xbf16>, vector<16x32xbf16>, vector<16x32xf32> -> vector<16x32xf32>
    %73 = arith.addf %68, %72 : vector<16x32xf32>
    %74 = math.tanh %50 : vector<16x16xf32>
    %75 = arith.truncf %74 : vector<16x16xf32> to vector<16x16xbf16>
    %76 = vector.extract_strided_slice %64 {offsets = [32, 0], sizes = [16, 32], strides = [1, 1]} : vector<48x32xbf16> to vector<16x32xbf16>
    %cst_41 = arith.constant dense<0.000000e+00> : vector<16x32xf32>
    %77 = tpu.matmul %75, %76, %cst_41 {dimension_numbers = #tpu.dot_dimension_numbers<[1], [0], [0], [1], [0, 0, 1, 1], [], []>} : vector<16x16xbf16>, vector<16x32xbf16>, vector<16x32xf32> -> vector<16x32xf32>
    %78 = arith.addf %73, %77 : vector<16x32xf32>
    %c0_42 = arith.constant 0 : index
    %c0_43 = arith.constant 0 : index
    %79 = vector.load %arg17[%c0_42, %c0_43] : memref<1x32xf32, #tpu.memory_space<vmem>>, vector<1x32xf32>
    %80 = vector.broadcast %79 : vector<1x32xf32> to vector<16x32xf32>
    %81 = arith.addf %78, %80 : vector<16x32xf32>
    %c0_44 = arith.constant 0 : index
    %c0_45 = arith.constant 0 : index
    %82 = vector.load %arg18[%c0_44, %c0_45] : memref<1x32xf32, #tpu.memory_space<vmem>>, vector<1x32xf32>
    %83 = vector.broadcast %82 : vector<1x32xf32> to vector<16x32xf32>
    %84 = arith.mulf %81, %83 : vector<16x32xf32>
    %cst_46 = arith.constant dense<0.000000e+00> : vector<16xf32>
    %85 = vector.multi_reduction <add>, %84, %cst_46 [1] : vector<16x32xf32> to vector<16xf32>
    %86 = vector.shape_cast %85 : vector<16xf32> to vector<16x1xf32>
    %c0_47 = arith.constant 0 : index
    %c0_48 = arith.constant 0 : index
    %87 = vector.load %arg19[%c0_47, %c0_48] : memref<1x1xf32, #tpu.memory_space<vmem>>, vector<1x1xf32>
    %88 = vector.broadcast %87 : vector<1x1xf32> to vector<16x1xf32>
    %89 = arith.addf %86, %88 : vector<16x1xf32>
    %90 = arith.negf %89 : vector<16x1xf32>
    %91 = math.exp %90 : vector<16x1xf32>
    %cst_49 = arith.constant 1.000000e+00 : f32
    %92 = vector.broadcast %cst_49 : f32 to vector<16x1xf32>
    %93 = arith.addf %92, %91 : vector<16x1xf32>
    %94 = arith.divf %92, %93 : vector<16x1xf32>
    %cst_50 = arith.constant 0.000000e+00 : bf16
    %95 = vector.broadcast %cst_50 : bf16 to vector<16x128xbf16>
    %c0_51 = arith.constant 0 : index
    %c0_52 = arith.constant 0 : index
    %96 = vector.load %arg20[%c0_51, %c0_52] : memref<16x128xbf16, #tpu.memory_space<vmem>>, vector<16x128xbf16>
    tpu.vector_store %arg20[%c0_51, %c0_52], %95 {strides = array<i32>} : memref<16x128xbf16, #tpu.memory_space<vmem>>, vector<16x128xbf16>,
    %97 = arith.truncf %20 : vector<16x32xf32> to vector<16x32xbf16>
    %c0_53 = arith.constant 0 : index
    %c0_54 = arith.constant 0 : index
    %98 = vector.load %arg20[%c0_53, %c0_54] : memref<16x128xbf16, #tpu.memory_space<vmem>>, vector<16x32xbf16>
    tpu.vector_store %arg20[%c0_53, %c0_54], %97 {strides = array<i32>} : memref<16x128xbf16, #tpu.memory_space<vmem>>, vector<16x32xbf16>,
    %99 = arith.truncf %41 : vector<16x24xf32> to vector<16x24xbf16>
    %c0_55 = arith.constant 0 : index
    %c32 = arith.constant 32 : index
    %100 = vector.load %arg20[%c0_55, %c32] : memref<16x128xbf16, #tpu.memory_space<vmem>>, vector<16x24xbf16>
    tpu.vector_store %arg20[%c0_55, %c32], %99 {strides = array<i32>} : memref<16x128xbf16, #tpu.memory_space<vmem>>, vector<16x24xbf16>,
    %101 = arith.truncf %62 : vector<16x16xf32> to vector<16x16xbf16>
    %c0_56 = arith.constant 0 : index
    %c56 = arith.constant 56 : index
    %102 = vector.load %arg20[%c0_56, %c56] : memref<16x128xbf16, #tpu.memory_space<vmem>>, vector<16x16xbf16>
    tpu.vector_store %arg20[%c0_56, %c56], %101 {strides = array<i32>} : memref<16x128xbf16, #tpu.memory_space<vmem>>, vector<16x16xbf16>,
    %103 = arith.truncf %94 : vector<16x1xf32> to vector<16x1xbf16>
    %c0_57 = arith.constant 0 : index
    %c72 = arith.constant 72 : index
    %104 = vector.load %arg20[%c0_57, %c72] : memref<16x128xbf16, #tpu.memory_space<vmem>>, vector<16x1xbf16>
    tpu.vector_store %arg20[%c0_57, %c72], %103 {strides = array<i32>} : memref<16x128xbf16, #tpu.memory_space<vmem>>, vector<16x1xbf16>,
    return
  }
  func.func @transform_0(%arg0: i32) -> (i32, i32) {
    %c0_i32 = arith.constant 0 : i32
    %c0_i32_0 = arith.constant 0 : i32
    return %arg0, %c0_i32 : i32, i32
  }
  func.func @transform_1(%arg0: i32) -> (i32, i32) {
    %c0_i32 = arith.constant 0 : i32
    %c0_i32_0 = arith.constant 0 : i32
    return %arg0, %c0_i32 : i32, i32
  }
  func.func @transform_2(%arg0: i32) -> (i32, i32) {
    %c0_i32 = arith.constant 0 : i32
    %c0_i32_0 = arith.constant 0 : i32
    return %arg0, %c0_i32 : i32, i32
  }
  func.func @transform_3(%arg0: i32) -> (i32, i32) {
    %c0_i32 = arith.constant 0 : i32
    %c0_i32_0 = arith.constant 0 : i32
    %c0_i32_1 = arith.constant 0 : i32
    return %c0_i32, %c0_i32_0 : i32, i32
  }
  func.func @transform_4(%arg0: i32) -> (i32, i32) {
    %c0_i32 = arith.constant 0 : i32
    %c0_i32_0 = arith.constant 0 : i32
    %c0_i32_1 = arith.constant 0 : i32
    return %c0_i32, %c0_i32_0 : i32, i32
  }
  func.func @transform_5(%arg0: i32) -> (i32, i32) {
    %c0_i32 = arith.constant 0 : i32
    %c0_i32_0 = arith.constant 0 : i32
    %c0_i32_1 = arith.constant 0 : i32
    return %c0_i32, %c0_i32_0 : i32, i32
  }
  func.func @transform_6(%arg0: i32) -> (i32, i32) {
    %c0_i32 = arith.constant 0 : i32
    %c0_i32_0 = arith.constant 0 : i32
    %c0_i32_1 = arith.constant 0 : i32
    return %c0_i32, %c0_i32_0 : i32, i32
  }
  func.func @transform_7(%arg0: i32) -> (i32, i32) {
    %c0_i32 = arith.constant 0 : i32
    %c0_i32_0 = arith.constant 0 : i32
    %c0_i32_1 = arith.constant 0 : i32
    return %c0_i32, %c0_i32_0 : i32, i32
  }
  func.func @transform_8(%arg0: i32) -> (i32, i32) {
    %c0_i32 = arith.constant 0 : i32
    %c0_i32_0 = arith.constant 0 : i32
    %c0_i32_1 = arith.constant 0 : i32
    return %c0_i32, %c0_i32_0 : i32, i32
  }
  func.func @transform_9(%arg0: i32) -> (i32, i32) {
    %c0_i32 = arith.constant 0 : i32
    %c0_i32_0 = arith.constant 0 : i32
    %c0_i32_1 = arith.constant 0 : i32
    return %c0_i32, %c0_i32_0 : i32, i32
  }
  func.func @transform_10(%arg0: i32) -> (i32, i32) {
    %c0_i32 = arith.constant 0 : i32
    %c0_i32_0 = arith.constant 0 : i32
    %c0_i32_1 = arith.constant 0 : i32
    return %c0_i32, %c0_i32_0 : i32, i32
  }
  func.func @transform_11(%arg0: i32) -> (i32, i32) {
    %c0_i32 = arith.constant 0 : i32
    %c0_i32_0 = arith.constant 0 : i32
    %c0_i32_1 = arith.constant 0 : i32
    return %c0_i32, %c0_i32_0 : i32, i32
  }
  func.func @transform_12(%arg0: i32) -> (i32, i32) {
    %c0_i32 = arith.constant 0 : i32
    %c0_i32_0 = arith.constant 0 : i32
    %c0_i32_1 = arith.constant 0 : i32
    return %c0_i32, %c0_i32_0 : i32, i32
  }
  func.func @transform_13(%arg0: i32) -> (i32, i32) {
    %c0_i32 = arith.constant 0 : i32
    %c0_i32_0 = arith.constant 0 : i32
    %c0_i32_1 = arith.constant 0 : i32
    return %c0_i32, %c0_i32_0 : i32, i32
  }
  func.func @transform_14(%arg0: i32) -> (i32, i32) {
    %c0_i32 = arith.constant 0 : i32
    %c0_i32_0 = arith.constant 0 : i32
    %c0_i32_1 = arith.constant 0 : i32
    return %c0_i32, %c0_i32_0 : i32, i32
  }
  func.func @transform_15(%arg0: i32) -> (i32, i32) {
    %c0_i32 = arith.constant 0 : i32
    %c0_i32_0 = arith.constant 0 : i32
    %c0_i32_1 = arith.constant 0 : i32
    return %c0_i32, %c0_i32_0 : i32, i32
  }
  func.func @transform_16(%arg0: i32) -> (i32, i32) {
    %c0_i32 = arith.constant 0 : i32
    %c0_i32_0 = arith.constant 0 : i32
    %c0_i32_1 = arith.constant 0 : i32
    return %c0_i32, %c0_i32_0 : i32, i32
  }
  func.func @transform_17(%arg0: i32) -> (i32, i32) {
    %c0_i32 = arith.constant 0 : i32
    %c0_i32_0 = arith.constant 0 : i32
    %c0_i32_1 = arith.constant 0 : i32
    return %c0_i32, %c0_i32_0 : i32, i32
  }
  func.func @transform_18(%arg0: i32) -> (i32, i32) {
    %c0_i32 = arith.constant 0 : i32
    %c0_i32_0 = arith.constant 0 : i32
    %c0_i32_1 = arith.constant 0 : i32
    return %c0_i32, %c0_i32_0 : i32, i32
  }
  func.func @transform_19(%arg0: i32) -> (i32, i32) {
    %c0_i32 = arith.constant 0 : i32
    %c0_i32_0 = arith.constant 0 : i32
    return %arg0, %c0_i32 : i32, i32
  }
}

</mosaic_0001>

<llo_original>
// kernel: dhne_forward_packed.1
$region0: #{dhne_forward_packed.1}
  #allocation0 [shape = 'u32[]', space=smem, size = 0x4, offset = 0x4, fixed_abs, tag = 'smem constant byte address 0x4 - core index']
  #allocation1 [shape = 'u32[72,128]{1,0:T(1,128)}', space=vmem, size = 0x9000, scoped, tag = 'internal scratch']
  #allocation2 [shape = 'f32[1,1]{1,0:T(1,128)S(1)}', space=vmem, size = 0x200, scoped, tag = 'scoped memory for dhne_forward_packed.1']
  %s0 = inlined_call_operand.vmem [shape: f32[16,32], index: 0, kind: input, shape index: {}]
  %s1 = inlined_call_operand.vmem [shape: f32[16,24], index: 1, kind: input, shape index: {}]
  %s2 = inlined_call_operand.vmem [shape: f32[16,16], index: 2, kind: input, shape index: {}]
  %s3 = inlined_call_operand.vmem [shape: f32[32,16], index: 3, kind: input, shape index: {}]
  %s4 = inlined_call_operand.vmem [shape: f32[1,16], index: 4, kind: input, shape index: {}]
  %s5 = inlined_call_operand.vmem [shape: f32[16,32], index: 5, kind: input, shape index: {}]
  %s6 = inlined_call_operand.vmem [shape: f32[1,32], index: 6, kind: input, shape index: {}]
  %s7 = inlined_call_operand.vmem [shape: f32[24,16], index: 7, kind: input, shape index: {}]
  %s8 = inlined_call_operand.vmem [shape: f32[1,16], index: 8, kind: input, shape index: {}]
  %s9 = inlined_call_operand.vmem [shape: f32[16,24], index: 9, kind: input, shape index: {}]
  %s10 = inlined_call_operand.vmem [shape: f32[1,24], index: 10, kind: input, shape index: {}]
  %s11 = inlined_call_operand.vmem [shape: f32[16,16], index: 11, kind: input, shape index: {}]
  %s12 = inlined_call_operand.vmem [shape: f32[1,16], index: 12, kind: input, shape index: {}]
  %s13 = inlined_call_operand.vmem [shape: f32[16,16], index: 13, kind: input, shape index: {}]
  %s14 = inlined_call_operand.vmem [shape: f32[1,16], index: 14, kind: input, shape index: {}]
  %s15 = inlined_call_operand.vmem [shape: f32[48,32], index: 15, kind: input, shape index: {}]
  %s16 = inlined_call_operand.vmem [shape: f32[1,32], index: 16, kind: input, shape index: {}]
  %s17 = inlined_call_operand.vmem [shape: f32[1,32], index: 17, kind: input, shape index: {}]
  %s18 = inlined_call_operand.<no memory space> [shape: f32[1,1], index: 18, kind: input, shape index: {}]
  %s19 = inlined_call_operand.hbm [shape: bf16[16,128], index: 19, kind: output, shape index: {}]
  %s20 = sld [smem:[#allocation0]]
  $region86: #{dhne_forward_packed.1} parent=0
    _
  %s22 = ssub.s32 1, %s20
  %s23 = scalar_select 0, %s22, %s20
  %v24 = vstv %s18
  %25 = vst [vmem:[#allocation2] sm:$0x1] %v24
  $region1: #{dhne_forward_packed.1} parent=0
    #allocation3 [shape = 'u8[4096]{0}', space=vmem, size = 0x1000, scoped, tag = 'output window, operand 0, single buffered']
    #allocation4 [shape = 's32[1]{0}', space=sflag, size = 0x4, scoped, tag = 'scoped memory for dhne_forward_packed.1']
    %26 = vsyncpa [#allocation4], 0
    // Predicated region
    $region2: #{dhne_forward_packed.1} parent=1 // pred_check
      _
    $region3: #{dhne_forward_packed.1} parent=1 // pred_check_branch
      %28 = sbr.rel (0) target = $region5
    $region4: #{dhne_forward_packed.1} parent=1 // pred_region
      _
    $region5: #{dhne_forward_packed.1} parent=1 // pred_fallthru
      _
    // Predicated region
    $region6: #{dhne_forward_packed.1} parent=1 // pred_check
      _
    $region7: #{dhne_forward_packed.1} parent=1 // pred_check_branch
      %30 = sbr.rel (0) target = $region9
    $region8: #{dhne_forward_packed.1} parent=1 // pred_region
      _
    $region9: #{dhne_forward_packed.1} parent=1 // pred_fallthru
      _
    // Predicated region
    $region10: #{dhne_forward_packed.1} parent=1 // pred_check
      _
    $region11: #{dhne_forward_packed.1} parent=1 // pred_check_branch
      %32 = sbr.rel (0) target = $region13
    $region12: #{dhne_forward_packed.1} parent=1 // pred_region
      _
    $region13: #{dhne_forward_packed.1} parent=1 // pred_fallthru
      _
    // Predicated region
    $region14: #{dhne_forward_packed.1} parent=1 // pred_check
      _
    $region15: #{dhne_forward_packed.1} parent=1 // pred_check_branch
      %34 = sbr.rel (0) target = $region17
    $region16: #{dhne_forward_packed.1} parent=1 // pred_region
      _
    $region17: #{dhne_forward_packed.1} parent=1 // pred_fallthru
      _
    // Predicated region
    $region18: #{dhne_forward_packed.1} parent=1 // pred_check
      _
    $region19: #{dhne_forward_packed.1} parent=1 // pred_check_branch
      %36 = sbr.rel (0) target = $region21
    $region20: #{dhne_forward_packed.1} parent=1 // pred_region
      _
    $region21: #{dhne_forward_packed.1} parent=1 // pred_fallthru
      _
    // Predicated region
    $region22: #{dhne_forward_packed.1} parent=1 // pred_check
      _
    $region23: #{dhne_forward_packed.1} parent=1 // pred_check_branch
      %38 = sbr.rel (0) target = $region25
    $region24: #{dhne_forward_packed.1} parent=1 // pred_region
      _
    $region25: #{dhne_forward_packed.1} parent=1 // pred_fallthru
      _
    // Predicated region
    $region26: #{dhne_forward_packed.1} parent=1 // pred_check
      _
    $region27: #{dhne_forward_packed.1} parent=1 // pred_check_branch
      %40 = sbr.rel (0) target = $region29
    $region28: #{dhne_forward_packed.1} parent=1 // pred_region
      _
    $region29: #{dhne_forward_packed.1} parent=1 // pred_fallthru
      _
    // Predicated region
    $region30: #{dhne_forward_packed.1} parent=1 // pred_check
      _
    $region31: #{dhne_forward_packed.1} parent=1 // pred_check_branch
      %42 = sbr.rel (0) target = $region33
    $region32: #{dhne_forward_packed.1} parent=1 // pred_region
      _
    $region33: #{dhne_forward_packed.1} parent=1 // pred_fallthru
      _
    // Predicated region
    $region34: #{dhne_forward_packed.1} parent=1 // pred_check
      _
    $region35: #{dhne_forward_packed.1} parent=1 // pred_check_branch
      %44 = sbr.rel (0) target = $region37
    $region36: #{dhne_forward_packed.1} parent=1 // pred_region
      _
    $region37: #{dhne_forward_packed.1} parent=1 // pred_fallthru
      _
    // Predicated region
    $region38: #{dhne_forward_packed.1} parent=1 // pred_check
      _
    $region39: #{dhne_forward_packed.1} parent=1 // pred_check_branch
      %46 = sbr.rel (0) target = $region41
    $region40: #{dhne_forward_packed.1} parent=1 // pred_region
      _
    $region41: #{dhne_forward_packed.1} parent=1 // pred_fallthru
      _
    // Predicated region
    $region42: #{dhne_forward_packed.1} parent=1 // pred_check
      _
    $region43: #{dhne_forward_packed.1} parent=1 // pred_check_branch
      %48 = sbr.rel (0) target = $region45
    $region44: #{dhne_forward_packed.1} parent=1 // pred_region
      _
    $region45: #{dhne_forward_packed.1} parent=1 // pred_fallthru
      _
    // Predicated region
    $region46: #{dhne_forward_packed.1} parent=1 // pred_check
      _
    $region47: #{dhne_forward_packed.1} parent=1 // pred_check_branch
      %50 = sbr.rel (0) target = $region49
    $region48: #{dhne_forward_packed.1} parent=1 // pred_region
      _
    $region49: #{dhne_forward_packed.1} parent=1 // pred_fallthru
      _
    // Predicated region
    $region50: #{dhne_forward_packed.1} parent=1 // pred_check
      _
    $region51: #{dhne_forward_packed.1} parent=1 // pred_check_branch
      %52 = sbr.rel (0) target = $region53
    $region52: #{dhne_forward_packed.1} parent=1 // pred_region
      _
    $region53: #{dhne_forward_packed.1} parent=1 // pred_fallthru
      _
    // Predicated region
    $region54: #{dhne_forward_packed.1} parent=1 // pred_check
      _
    $region55: #{dhne_forward_packed.1} parent=1 // pred_check_branch
      %54 = sbr.rel (0) target = $region57
    $region56: #{dhne_forward_packed.1} parent=1 // pred_region
      _
    $region57: #{dhne_forward_packed.1} parent=1 // pred_fallthru
      _
    // Predicated region
    $region58: #{dhne_forward_packed.1} parent=1 // pred_check
      _
    $region59: #{dhne_forward_packed.1} parent=1 // pred_check_branch
      %56 = sbr.rel (0) target = $region61
    $region60: #{dhne_forward_packed.1} parent=1 // pred_region
      _
    $region61: #{dhne_forward_packed.1} parent=1 // pred_fallthru
      _
    // Predicated region
    $region62: #{dhne_forward_packed.1} parent=1 // pred_check
      _
    $region63: #{dhne_forward_packed.1} parent=1 // pred_check_branch
      %58 = sbr.rel (0) target = $region65
    $region64: #{dhne_forward_packed.1} parent=1 // pred_region
      _
    $region65: #{dhne_forward_packed.1} parent=1 // pred_fallthru
      _
    // Predicated region
    $region66: #{dhne_forward_packed.1} parent=1 // pred_check
      _
    $region67: #{dhne_forward_packed.1} parent=1 // pred_check_branch
      %60 = sbr.rel (0) target = $region69
    $region68: #{dhne_forward_packed.1} parent=1 // pred_region
      _
    $region69: #{dhne_forward_packed.1} parent=1 // pred_fallthru
      _
    // Predicated region
    $region70: #{dhne_forward_packed.1} parent=1 // pred_check
      _
    $region71: #{dhne_forward_packed.1} parent=1 // pred_check_branch
      %62 = sbr.rel (0) target = $region73
    $region72: #{dhne_forward_packed.1} parent=1 // pred_region
      _
    $region73: #{dhne_forward_packed.1} parent=1 // pred_fallthru
      _
    // Predicated region
    $region74: #{dhne_forward_packed.1} parent=1 // pred_check
      _
    $region75: #{dhne_forward_packed.1} parent=1 // pred_check_branch
      %64 = sbr.rel (0) target = $region77
    $region76: #{dhne_forward_packed.1} parent=1 // pred_region
      _
    $region77: #{dhne_forward_packed.1} parent=1 // pred_fallthru
      _
    %v66 = vld [vmem:[%s0] sm:$0xff]
    %v67 = vld [vmem:[%s0 + $0x8] sm:$0xff]
    %v68 = vpack.c.bf16 %v67, %v66
    %v69 = vld [vmem:[%s3] sm:$0xff]
    %v70 = vld [vmem:[%s3 + $0x8] sm:$0xff]
    %v71 = vld [vmem:[%s3 + $0x10] sm:$0xff]
    %v72 = vld [vmem:[%s3 + $0x18] sm:$0xff]
    %v73 = vpack.c.bf16 %v70, %v69
    %v74 = vpack.c.bf16 %v72, %v71
    %v75 = vld [vmem:[%s4] sm:$0x1]
    %v77 = vperm.slane %v75, 0
    %vm79 = vcmask 261120
    %v81 = vsel %vm79, %v68, 0
    %83 = vmatpush.bf16.msra.mxu0 0
    %84 = vmatpush.bf16.msra.mxu0 0
    %85 = vmatpush.bf16.msra.mxu0 0
    %86 = vmatpush.bf16.msra.mxu0 0
    %87 = vmatpush.bf16.msra.mxu0 0
    %88 = vmatpush.bf16.msra.mxu0 0
    %89 = vmatpush.bf16.msra.mxu0 %v74
    %90 = vmatpush.bf16.msra.mxu0 %v73
    %91 = vmatmul.bf16.gmra.mxu0 %v81
    %v92 = vpop.f32.mrf.mxu0
    %v93 = vadd.f32 %v77, %v92
    %v94 = vpop.f32.mrf.mxu0
    %v95 = vadd.f32 %v77, %v94
    %96 = vdwg.mxu0
    %v97 = vtanh.pop %v93
    %v98 = vtanh.pop %v95
    %v99 = vpack.c.bf16 %v98, %v97
    %v100 = vld [vmem:[%s5] sm:$0xff]
    %v101 = vld [vmem:[%s5 + $0x8] sm:$0xff]
    %v102 = vpack.c.bf16 %v101, %v100
    %v103 = vld [vmem:[%s6] sm:$0x1]
    %v105 = vperm.slane %v103, 0
    %vm107 = vcmask 130048
    %v109 = vsel %vm107, %v99, 0
    %111 = vmatpush.bf16.msra.mxu0 0
    %112 = vmatpush.bf16.msra.mxu0 0
    %113 = vmatpush.bf16.msra.mxu0 0
    %114 = vmatpush.bf16.msra.mxu0 0
    %115 = vmatpush.bf16.msra.mxu0 0
    %116 = vmatpush.bf16.msra.mxu0 0
    %117 = vmatpush.bf16.msra.mxu0 0
    %118 = vmatpush.bf16.msra.mxu0 %v102
    %119 = vmatmul.bf16.gmra.mxu0 %v109
    %v120 = vpop.f32.mrf.mxu0
    %v121 = vadd.f32 %v105, %v120
    %v122 = vpop.f32.mrf.mxu0
    %v123 = vadd.f32 %v105, %v122
    %124 = vdwg.mxu0
    %v125 = vxor.u32 %v121, 2147483648
    %v126 = vxor.u32 %v123, 2147483648
    %v127 = vmul.f32 %v125, 1.442695
    %v128 = vpow.pop %v127
    %v129 = vmul.f32 %v126, 1.442695
    %v130 = vpow.pop %v129
    %v131 = vadd.f32 %v128, 1.0
    %v132 = vadd.f32 %v130, 1.0
    %v133 = vrcp.pop %v131
    %v134 = vmul.f32 %v131, %v133
    %v135 = vsub.f32 1.0, %v134
    %v136 = vmul.f32 %v133, %v135
    %v137 = vadd.f32 %v133, %v136
    %vm138 = vweird.f32 %v131
    %vm139 = vweird.f32 %v133
    %vm140 = vmor %vm138, %vm139
    %v141 = vsel %vm140, %v133, %v137
    %v142 = vand.u32 2147483647, %v131
    %vm143 = vcmp.eq.f32.partialorder %v142, 8.507059e+37
    %v144 = vand.u32 %v131, 2147483648
    %v145 = vor.u32 1.1754944e-38, %v144
    %v146 = vsel %vm143, %v145, %v141
    %v147 = vmul.f32 1.0, %v146
    %v148 = vrcp.pop %v132
    %v149 = vmul.f32 %v132, %v148
    %v150 = vsub.f32 1.0, %v149
    %v151 = vmul.f32 %v148, %v150
    %v152 = vadd.f32 %v148, %v151
    %vm153 = vweird.f32 %v132
    %vm154 = vweird.f32 %v148
    %vm155 = vmor %vm153, %vm154
    %v156 = vsel %vm155, %v148, %v152
    %v157 = vand.u32 2147483647, %v132
    %vm158 = vcmp.eq.f32.partialorder %v157, 8.507059e+37
    %v159 = vand.u32 %v132, 2147483648
    %v160 = vor.u32 1.1754944e-38, %v159
    %v161 = vsel %vm158, %v160, %v156
    %v162 = vmul.f32 1.0, %v161
    %v163 = vld [vmem:[%s1] sm:$0xff]
    %v164 = vld [vmem:[%s1 + $0x8] sm:$0xff]
    %v165 = vpack.c.bf16 %v164, %v163
    %v166 = vld [vmem:[%s7] sm:$0xff]
    %v167 = vld [vmem:[%s7 + $0x8] sm:$0xff]
    %v168 = vld [vmem:[%s7 + $0x10] sm:$0xff]
    %v169 = vpack.c.bf16 %v167, %v166
    %v170 = vpack.c.bf16 %v168, %v168
    %v171 = vld [vmem:[%s8] sm:$0x1]
    %v173 = vperm.slane %v171, 0
    %vm175 = vcmask 195584
    %v177 = vsel %vm175, %v165, 0
    %vm179 = vcmask 1043456
    %v181 = vsel %vm179, %v170, 0
    %183 = vmatpush.bf16.msra.mxu0 0
    %184 = vmatpush.bf16.msra.mxu0 0
    %185 = vmatpush.bf16.msra.mxu0 0
    %186 = vmatpush.bf16.msra.mxu0 0
    %187 = vmatpush.bf16.msra.mxu0 0
    %188 = vmatpush.bf16.msra.mxu0 0
    %189 = vmatpush.bf16.msra.mxu0 %v181
    %190 = vmatpush.bf16.msra.mxu0 %v169
    %191 = vmatmul.bf16.gmra.mxu0 %v177
    %v192 = vpop.f32.mrf.mxu0
    %v193 = vadd.f32 %v173, %v192
    %v194 = vpop.f32.mrf.mxu0
    %v195 = vadd.f32 %v173, %v194
    %196 = vdwg.mxu0
    %v197 = vtanh.pop %v193
    %v198 = vtanh.pop %v195
    %v199 = vpack.c.bf16 %v198, %v197
    %v200 = vld [vmem:[%s9] sm:$0xff]
    %v201 = vld [vmem:[%s9 + $0x8] sm:$0xff]
    %v202 = vpack.c.bf16 %v201, %v200
    %v203 = vld [vmem:[%s10] sm:$0x1]
    %v205 = vperm.slane %v203, 0
    %v208 = vsel %vm107, %v199, 0
    %210 = vmatpush.bf16.msra.mxu0 0
    %211 = vmatpush.bf16.msra.mxu0 0
    %212 = vmatpush.bf16.msra.mxu0 0
    %213 = vmatpush.bf16.msra.mxu0 0
    %214 = vmatpush.bf16.msra.mxu0 0
    %215 = vmatpush.bf16.msra.mxu0 0
    %216 = vmatpush.bf16.msra.mxu0 0
    %217 = vmatpush.bf16.msra.mxu0 %v202
    %218 = vmatmul.bf16.gmra.mxu0 %v208
    %v219 = vpop.f32.mrf.mxu0
    %v220 = vadd.f32 %v205, %v219
    %v221 = vpop.f32.mrf.mxu0
    %v222 = vadd.f32 %v205, %v221
    %223 = vdwg.mxu0
    %v224 = vxor.u32 %v220, 2147483648
    %v225 = vxor.u32 %v222, 2147483648
    %v226 = vmul.f32 %v224, 1.442695
    %v227 = vpow.pop %v226
    %v228 = vmul.f32 %v225, 1.442695
    %v229 = vpow.pop %v228
    %v230 = vadd.f32 %v227, 1.0
    %v231 = vadd.f32 %v229, 1.0
    %v232 = vrcp.pop %v230
    %v233 = vmul.f32 %v230, %v232
    %v234 = vsub.f32 1.0, %v233
    %v235 = vmul.f32 %v232, %v234
    %v236 = vadd.f32 %v232, %v235
    %vm237 = vweird.f32 %v230
    %vm238 = vweird.f32 %v232
    %vm239 = vmor %vm237, %vm238
    %v240 = vsel %vm239, %v232, %v236
    %v241 = vand.u32 2147483647, %v230
    %vm242 = vcmp.eq.f32.partialorder %v241, 8.507059e+37
    %v243 = vand.u32 %v230, 2147483648
    %v244 = vor.u32 1.1754944e-38, %v243
    %v245 = vsel %vm242, %v244, %v240
    %v246 = vmul.f32 1.0, %v245
    %v247 = vrcp.pop %v231
    %v248 = vmul.f32 %v231, %v247
    %v249 = vsub.f32 1.0, %v248
    %v250 = vmul.f32 %v247, %v249
    %v251 = vadd.f32 %v247, %v250
    %vm252 = vweird.f32 %v231
    %vm253 = vweird.f32 %v247
    %vm254 = vmor %vm252, %vm253
    %v255 = vsel %vm254, %v247, %v251
    %v256 = vand.u32 2147483647, %v231
    %vm257 = vcmp.eq.f32.partialorder %v256, 8.507059e+37
    %v258 = vand.u32 %v231, 2147483648
    %v259 = vor.u32 1.1754944e-38, %v258
    %v260 = vsel %vm257, %v259, %v255
    %v261 = vmul.f32 1.0, %v260
    %v262 = vld [vmem:[%s2] sm:$0xff]
    %v263 = vld [vmem:[%s2 + $0x8] sm:$0xff]
    %v264 = vpack.c.bf16 %v263, %v262
    %v265 = vld [vmem:[%s11] sm:$0xff]
    %v266 = vld [vmem:[%s11 + $0x8] sm:$0xff]
    %v267 = vpack.c.bf16 %v266, %v265
    %v268 = vld [vmem:[%s12] sm:$0x1]
    %v270 = vperm.slane %v268, 0
    %v273 = vsel %vm107, %v264, 0
    %275 = vmatpush.bf16.msra.mxu0 0
    %276 = vmatpush.bf16.msra.mxu0 0
    %277 = vmatpush.bf16.msra.mxu0 0
    %278 = vmatpush.bf16.msra.mxu0 0
    %279 = vmatpush.bf16.msra.mxu0 0
    %280 = vmatpush.bf16.msra.mxu0 0
    %281 = vmatpush.bf16.msra.mxu0 0
    %282 = vmatpush.bf16.msra.mxu0 %v267
    %283 = vmatmul.bf16.gmra.mxu0 %v273
    %v284 = vpop.f32.mrf.mxu0
    %v285 = vadd.f32 %v270, %v284
    %v286 = vpop.f32.mrf.mxu0
    %v287 = vadd.f32 %v270, %v286
    %288 = vdwg.mxu0
    %v289 = vtanh.pop %v285
    %v290 = vtanh.pop %v287
    %v291 = vpack.c.bf16 %v290, %v289
    %v292 = vld [vmem:[%s13] sm:$0xff]
    %v293 = vld [vmem:[%s13 + $0x8] sm:$0xff]
    %v294 = vpack.c.bf16 %v293, %v292
    %v295 = vld [vmem:[%s14] sm:$0x1]
    %v297 = vperm.slane %v295, 0
    %v300 = vsel %vm107, %v291, 0
    %302 = vmatpush.bf16.msra.mxu0 0
    %303 = vmatpush.bf16.msra.mxu0 0
    %304 = vmatpush.bf16.msra.mxu0 0
    %305 = vmatpush.bf16.msra.mxu0 0
    %306 = vmatpush.bf16.msra.mxu0 0
    %307 = vmatpush.bf16.msra.mxu0 0
    %308 = vmatpush.bf16.msra.mxu0 0
    %309 = vmatpush.bf16.msra.mxu0 %v294
    %310 = vmatmul.bf16.gmra.mxu0 %v300
    %v311 = vpop.f32.mrf.mxu0
    %v312 = vadd.f32 %v297, %v311
    %v313 = vpop.f32.mrf.mxu0
    %v314 = vadd.f32 %v297, %v313
    %315 = vdwg.mxu0
    %v316 = vxor.u32 %v312, 2147483648
    %v317 = vxor.u32 %v314, 2147483648
    %v318 = vmul.f32 %v316, 1.442695
    %v319 = vpow.pop %v318
    %v320 = vmul.f32 %v317, 1.442695
    %v321 = vpow.pop %v320
    %v322 = vadd.f32 %v319, 1.0
    %v323 = vadd.f32 %v321, 1.0
    %v324 = vrcp.pop %v322
    %v325 = vmul.f32 %v322, %v324
    %v326 = vsub.f32 1.0, %v325
    %v327 = vmul.f32 %v324, %v326
    %v328 = vadd.f32 %v324, %v327
    %vm329 = vweird.f32 %v322
    %vm330 = vweird.f32 %v324
    %vm331 = vmor %vm329, %vm330
    %v332 = vsel %vm331, %v324, %v328
    %v333 = vand.u32 2147483647, %v322
    %vm334 = vcmp.eq.f32.partialorder %v333, 8.507059e+37
    %v335 = vand.u32 %v322, 2147483648
    %v336 = vor.u32 1.1754944e-38, %v335
    %v337 = vsel %vm334, %v336, %v332
    %v338 = vmul.f32 1.0, %v337
    %v339 = vrcp.pop %v323
    %v340 = vmul.f32 %v323, %v339
    %v341 = vsub.f32 1.0, %v340
    %v342 = vmul.f32 %v339, %v341
    %v343 = vadd.f32 %v339, %v342
    %vm344 = vweird.f32 %v323
    %vm345 = vweird.f32 %v339
    %vm346 = vmor %vm344, %vm345
    %v347 = vsel %vm346, %v339, %v343
    %v348 = vand.u32 2147483647, %v323
    %vm349 = vcmp.eq.f32.partialorder %v348, 8.507059e+37
    %v350 = vand.u32 %v323, 2147483648
    %v351 = vor.u32 1.1754944e-38, %v350
    %v352 = vsel %vm349, %v351, %v347
    %v353 = vmul.f32 1.0, %v352
    %v354 = vld [vmem:[%s15] sm:$0xff]
    %v355 = vld [vmem:[%s15 + $0x8] sm:$0xff]
    %v356 = vld [vmem:[%s15 + $0x10] sm:$0xff]
    %v357 = vld [vmem:[%s15 + $0x18] sm:$0xff]
    %v358 = vld [vmem:[%s15 + $0x20] sm:$0xff]
    %v359 = vld [vmem:[%s15 + $0x28] sm:$0xff]
    %v360 = vpack.c.bf16 %v354, %v354
    %v361 = vpack.c.bf16 %v355, %v355
    %v362 = vpack.c.bf16 %v356, %v356
    %v363 = vpack.c.bf16 %v357, %v357
    %v364 = vpack.c.bf16 %v358, %v358
    %v365 = vpack.c.bf16 %v359, %v359
    %v366 = vtanh.pop %v97
    %v367 = vtanh.pop %v98
    %v368 = vpack.c.bf16 %v367, %v366
    %v369 = vtanh.pop %v197
    %v370 = vtanh.pop %v198
    %v371 = vpack.c.bf16 %v370, %v369
    %v374 = vunpack.c.l.b16 %v362
    %v375 = vunpack.c.l.b16 %v363
    %v376 = vpack.c.b16 %v375, %v374
    %v379 = vsel %vm107, %v371, 0
    %381 = vmatpush.bf16.msra.mxu0 0
    %382 = vmatpush.bf16.msra.mxu0 0
    %383 = vmatpush.bf16.msra.mxu0 0
    %384 = vmatpush.bf16.msra.mxu0 0
    %385 = vmatpush.bf16.msra.mxu0 0
    %386 = vmatpush.bf16.msra.mxu0 0
    %387 = vmatpush.bf16.msra.mxu0 0
    %388 = vmatpush.bf16.msra.mxu0 %v376
    %389 = vmatmul.bf16.gmra.mxu0 %v379
    %v390 = vpop.f32.mrf.mxu0
    %v391 = vadd.f32 0.0, %v390
    %v392 = vpop.f32.mrf.mxu0
    %v393 = vadd.f32 0.0, %v392
    %394 = vdwg.mxu0
    %v397 = vunpack.c.l.b16 %v360
    %v398 = vunpack.c.l.b16 %v361
    %v399 = vpack.c.b16 %v398, %v397
    %v402 = vsel %vm107, %v368, 0
    %404 = vmatpush.bf16.msra.mxu0 0
    %405 = vmatpush.bf16.msra.mxu0 0
    %406 = vmatpush.bf16.msra.mxu0 0
    %407 = vmatpush.bf16.msra.mxu0 0
    %408 = vmatpush.bf16.msra.mxu0 0
    %409 = vmatpush.bf16.msra.mxu0 0
    %410 = vmatpush.bf16.msra.mxu0 0
    %411 = vmatpush.bf16.msra.mxu0 %v399
    %412 = vmatmul.bf16.gmra.mxu0 %v402
    %v413 = vpop.f32.mrf.mxu0
    %v414 = vadd.f32 %v391, %v413
    %v415 = vpop.f32.mrf.mxu0
    %v416 = vadd.f32 %v393, %v415
    %417 = vdwg.mxu0
    %v418 = vtanh.pop %v289
    %v419 = vtanh.pop %v290
    %v420 = vpack.c.bf16 %v419, %v418
    %v423 = vunpack.c.l.b16 %v364
    %v424 = vunpack.c.l.b16 %v365
    %v425 = vpack.c.b16 %v424, %v423
    %v428 = vsel %vm107, %v420, 0
    %430 = vmatpush.bf16.msra.mxu0 0
    %431 = vmatpush.bf16.msra.mxu0 0
    %432 = vmatpush.bf16.msra.mxu0 0
    %433 = vmatpush.bf16.msra.mxu0 0
    %434 = vmatpush.bf16.msra.mxu0 0
    %435 = vmatpush.bf16.msra.mxu0 0
    %436 = vmatpush.bf16.msra.mxu0 0
    %437 = vmatpush.bf16.msra.mxu0 %v425
    %438 = vmatmul.bf16.gmra.mxu0 %v428
    %v439 = vpop.f32.mrf.mxu0
    %v440 = vadd.f32 0.0, %v439
    %v441 = vpop.f32.mrf.mxu0
    %v442 = vadd.f32 0.0, %v441
    %443 = vdwg.mxu0
    %v444 = vadd.f32 %v414, %v440
    %v445 = vadd.f32 %v416, %v442
    %v446 = vld [vmem:[%s16] sm:$0x1]
    %v448 = vperm.slane %v446, 0
    %v450 = vadd.f32 %v444, %v448
    %v451 = vadd.f32 %v445, %v448
    %v452 = vld [vmem:[%s17] sm:$0x1]
    %v454 = vperm.slane %v452, 0
    %v456 = vmul.f32 %v450, %v454
    %v457 = vmul.f32 %v451, %v454
    %v458 = vsel %vm79, %v456, 0.0
    %459 = vadd.xlane.f32.xlu0 %v458
    %v460 = vpop.xlane.xlu0 %459
    %v461 = vsel %vm79, %v457, 0.0
    %462 = vadd.xlane.f32.xlu0 %v461
    %v463 = vpop.xlane.xlu0 %462
    %v464 = vld [vmem:[#allocation2] sm:$0x1]
    %v466 = vperm.slane %v464, 0
    %v468 = vadd.f32 %v460, %v466
    %v469 = vadd.f32 %v463, %v466
    %v470 = vxor.u32 %v468, 2147483648
    %v471 = vxor.u32 %v469, 2147483648
    %v472 = vmul.f32 %v470, 1.442695
    %v473 = vpow.pop %v472
    %v474 = vmul.f32 %v471, 1.442695
    %v475 = vpow.pop %v474
    %v476 = vadd.f32 %v473, 1.0
    %v477 = vadd.f32 %v475, 1.0
    %v478 = vrcp.pop %v476
    %v479 = vmul.f32 %v476, %v478
    %v480 = vsub.f32 1.0, %v479
    %v481 = vmul.f32 %v478, %v480
    %v482 = vadd.f32 %v478, %v481
    %vm483 = vweird.f32 %v476
    %vm484 = vweird.f32 %v478
    %vm485 = vmor %vm483, %vm484
    %v486 = vsel %vm485, %v478, %v482
    %v487 = vand.u32 2147483647, %v476
    %vm488 = vcmp.eq.f32.partialorder %v487, 8.507059e+37
    %v489 = vand.u32 %v476, 2147483648
    %v490 = vor.u32 1.1754944e-38, %v489
    %v491 = vsel %vm488, %v490, %v486
    %v492 = vmul.f32 1.0, %v491
    %v493 = vrcp.pop %v477
    %v494 = vmul.f32 %v477, %v493
    %v495 = vsub.f32 1.0, %v494
    %v496 = vmul.f32 %v493, %v495
    %v497 = vadd.f32 %v493, %v496
    %vm498 = vweird.f32 %v477
    %vm499 = vweird.f32 %v493
    %vm500 = vmor %vm498, %vm499
    %v501 = vsel %vm500, %v493, %v497
    %v502 = vand.u32 2147483647, %v477
    %vm503 = vcmp.eq.f32.partialorder %v502, 8.507059e+37
    %v504 = vand.u32 %v477, 2147483648
    %v505 = vor.u32 1.1754944e-38, %v504
    %v506 = vsel %vm503, %v505, %v501
    %v507 = vmul.f32 1.0, %v506
    %508 = vst [vmem:[#allocation3] sm:$0xf] 0
    %509 = vst [vmem:[#allocation3 + $0x4] sm:$0xf] 0
    %v510 = vpack.c.bf16 %v147, %v147
    %v511 = vpack.c.bf16 %v162, %v162
    %vm512 = vcmask 257024
    %513 = vst.msk [vmem:[#allocation3] sm:$0xf] %vm512, %v510
    %514 = vst.msk [vmem:[#allocation3 + $0x4] sm:$0xf] %vm512, %v511
    %v515 = vpack.c.bf16 %v246, %v246
    %v516 = vpack.c.bf16 %v261, %v261
    %519 = vrot.lane.b32.xlu0 %v515, 32
    %v520 = vpop.permute.xlu0 %519
    %521 = vrot.lane.b32.xlu0 %v516, 32
    %v522 = vpop.permute.xlu0 %521
    %vm525 = vcmask 453888
    %526 = vst.msk [vmem:[#allocation3] sm:$0xf] %vm525, %v520
    %527 = vst.msk [vmem:[#allocation3 + $0x4] sm:$0xf] %vm525, %v522
    %v528 = vpack.c.bf16 %v338, %v338
    %v529 = vpack.c.bf16 %v353, %v353
    %532 = vrot.lane.b32.xlu0 %v528, 56
    %v533 = vpop.permute.xlu0 %532
    %534 = vrot.lane.b32.xlu0 %v529, 56
    %v535 = vpop.permute.xlu0 %534
    %vm538 = vcmask 585152
    %539 = vst.msk [vmem:[#allocation3] sm:$0xf] %vm538, %v533
    %540 = vst.msk [vmem:[#allocation3 + $0x4] sm:$0xf] %vm538, %v535
    %v541 = vpack.c.bf16 %v492, %v492
    %v542 = vpack.c.bf16 %v507, %v507
    %545 = vrot.lane.b32.xlu0 %v541, 72
    %v546 = vpop.permute.xlu0 %545
    %547 = vrot.lane.b32.xlu0 %v542, 72
    %v548 = vpop.permute.xlu0 %547
    %vm551 = vcmask 593472
    %552 = vst.msk [vmem:[#allocation3] sm:$0xf] %vm551, %v546
    %553 = vst.msk [vmem:[#allocation3 + $0x4] sm:$0xf] %vm551, %v548
    // Predicated region
    $region78: #{dhne_forward_packed.1} parent=1 // pred_check
      _
    $region79: #{dhne_forward_packed.1} parent=1 // pred_check_branch
      %555 = sbr.rel (0) target = $region81
    $region80: #{dhne_forward_packed.1} parent=1 // pred_region
      %557 = vsyncadd [#allocation4], 0
      %s558 = sshll.u32 [#allocation3], 4
      %s559 = int_to_ptr.vmem [resolvable:$true] %s558
      %s560 = sshll.u32 %s19, 4
      %s561 = int_to_ptr.hbm [resolvable:$true] %s560
      %566 = dma.vmem_to_hbm [thread:$0]  %s559, 128, %s561, [#allocation4], 64, 64, 4
    $region81: #{dhne_forward_packed.1} parent=1 // pred_fallthru
      _
    // Predicated region
    $region82: #{dhne_forward_packed.1} parent=1 // pred_check
      _
    $region83: #{dhne_forward_packed.1} parent=1 // pred_check_branch
      %568 = sbr.rel (0) target = $region85
    $region84: #{dhne_forward_packed.1} parent=1 // pred_region
      %570 = dma.done [#allocation4], 128
    $region85: #{dhne_forward_packed.1} parent=1 // pred_fallthru
      _
    %571 = vsyncpa [#allocation4], 1

</llo_original>
